<compile_context>
chip_gen: v5e
topology: v5e:2x2
jax: 0.10.0
libtpu: 0.0.40
codegen_flags: <defaults>
</compile_context>

<pallas_src>
import jax
import jax.numpy as jnp
from jax import lax
from jax.experimental import pallas as pl
from jax.experimental.pallas import tpu as pltpu

NEG_SLOPE = 0.01  # F.leaky_relu default


def _leaky(x):
    return jnp.where(x > 0, x, NEG_SLOPE * x)


def res_down_block_kernel(x_ref, w1_ref, m2_ref, w3_ref, s_ref, o_ref, pad_ref):
    # x_ref / o_ref block: (NB*H, W*C)   lane-folded NHWC activations
    # w1_ref / w3_ref:     (W*C, W*C)    block-diagonal BN-folded 1x1 weights
    # m2_ref:              (3, W*C, W*C) banded BN-folded 3x3 weights (one per dy)
    # s_ref:               (3, 1, W*C)   folded bias+BN shifts, tiled over W
    # pad_ref (scratch):   (NB, H+2, W*C) H-padded staging buffer for the 3x3 conv
    NB, Hp2, WC = pad_ref.shape
    H = Hp2 - 2
    R = NB * H

    # Zero the scratch only on the first grid step: the two halo rows per image
    # are never written afterwards and the interior is fully overwritten each step.
    @pl.when(pl.program_id(0) == 0)
    def _():
        pad_ref[...] = jnp.zeros_like(pad_ref)

    x = x_ref[...]                                   # (R, WC), also the residual

    # ---- conv1 (1x1) + bn1 (folded) + leaky_relu ----
    h1 = jnp.dot(x, w1_ref[...], preferred_element_type=jnp.float32)
    h1 = _leaky(h1 + s_ref[0])

    # ---- conv2 (3x3, stride=1, padding=1) + bn2 (folded) + leaky_relu ----
    # W-padding and the 3 horizontal taps are folded into the banded matrices,
    # so the conv is 3 lane-dense matmuls over row-shifted slices of the
    # H-padded scratch, accumulated in a single (R, WC) register accumulator.
    pad_ref[:, 1:H + 1, :] = h1.reshape(NB, H, WC)
    acc = jnp.zeros((R, WC), jnp.float32)
    for dy in range(3):
        rows = pad_ref[:, dy:dy + H, :].reshape(R, WC)
        acc = acc + jnp.dot(rows, m2_ref[dy], preferred_element_type=jnp.float32)
    h2 = _leaky(acc + s_ref[1])

    # ---- conv3 (1x1) + bn3 (folded) + residual + leaky_relu ----
    h3 = jnp.dot(h2, w3_ref[...], preferred_element_type=jnp.float32) + s_ref[2]
    o_ref[...] = _leaky(h3 + x)


def res_down_block(x_nhwc, params, block_n=None):
    """ResDownBlock forward (stride=1, downsample=None). x_nhwc: (N,H,W,C) f32."""
    N, H, W, C = x_nhwc.shape
    (w1, b1, bn1, w2, b2, bn2, w3, b3, bn3) = params
    WC = W * C

    # ---- fold BN (inference affine) into conv weights and per-stage shifts ----
    def fold(w, b, bn):            # w: (..., Cin, Cout), b: (Cout,), bn: (2, Cout)
        scale, shift = bn[0], bn[1]
        return w * scale, b * scale + shift

    w1f, sh1 = fold(w1, b1, bn1)                     # (C, C), (C,)
    w2f, sh2 = fold(w2, b2, bn2)                     # (3, 3, C, C), (C,)
    w3f, sh3 = fold(w3, b3, bn3)

    # ---- expand weights to lane-folded (w, c) block / banded matrices ----
    def eye(k):
        return jnp.eye(W, W, k=k, dtype=jnp.float32)

    w1blk = jnp.kron(jnp.eye(W, dtype=jnp.float32), w1f)          # (WC, WC)
    w3blk = jnp.kron(jnp.eye(W, dtype=jnp.float32), w3f)          # (WC, WC)
    # m2[dy][w'*C+ci, w*C+co] = w2f[dy, w'-w+1, ci, co] for |w'-w| <= 1, else 0
    m2 = jnp.stack([
        sum(jnp.kron(eye(1 - dx), w2f[dy, dx]) for dx in range(3))
        for dy in range(3)])                                        # (3, WC, WC)
    shifts = jnp.stack([jnp.tile(sh1, W), jnp.tile(sh2, W),
                        jnp.tile(sh3, W)])[:, None, :]              # (3, 1, WC)

    # ---- lane-dense activation layout at the pallas_call boundary ----
    x2d = x_nhwc.reshape(N * H, WC)

    NB = N if block_n is None else block_n           # whole batch per grid step
    assert N % NB == 0
    grid = (N // NB,)
    # NOTE(v7x): at larger sizes pick NB so the grid length is a multiple of 2
    # (megacore) and re-budget the scratch/blocks against 64 MiB VMEM.

    def const_spec(a):
        return pl.BlockSpec(a.shape, lambda i, n=a.ndim: (0,) * n)

    out2d = pl.pallas_call(
        res_down_block_kernel,
        out_shape=jax.ShapeDtypeStruct((N * H, WC), jnp.float32),
        grid_spec=pltpu.PrefetchScalarGridSpec(
            num_scalar_prefetch=0,
            grid=grid,
            in_specs=[
                pl.BlockSpec((NB * H, WC), lambda i: (i, 0)),
                const_spec(w1blk),
                const_spec(m2),
                const_spec(w3blk),
                const_spec(shifts),
            ],
            out_specs=pl.BlockSpec((NB * H, WC), lambda i: (i, 0)),
            scratch_shapes=[pltpu.VMEM((NB, H + 2, WC), jnp.float32)],
        ),
        # "arbitrary": the scratch halo is zeroed only on step 0 and reused, so
        # grid steps are not independent (grid has length 1 here anyway).
        compiler_params=pltpu.CompilerParams(
            dimension_semantics=("arbitrary",)),
    )(x2d, w1blk, m2, w3blk, shifts)

    return out2d.reshape(N, H, W, C)


# ---------------- pure-JAX reference (for correctness check) ----------------
def ref_forward(x, params):
    (w1, b1, bn1, w2, b2, bn2, w3, b3, bn3) = params

    def conv(h, w_hwio, b):
        y = lax.conv_general_dilated(
            h, w_hwio, window_strides=(1, 1), padding="SAME",
            dimension_numbers=("NHWC", "HWIO", "NHWC"))
        return y + b.reshape(1, 1, 1, -1)

    def bn(h, p):
        return h * p[0].reshape(1, 1, 1, -1) + p[1].reshape(1, 1, 1, -1)

    out = jax.nn.leaky_relu(bn(conv(x, w1[None, None], b1), bn1), NEG_SLOPE)
    out = jax.nn.leaky_relu(bn(conv(out, w2, b2), bn2), NEG_SLOPE)
    out = bn(conv(out, w3[None, None], b3), bn3)
    return jax.nn.leaky_relu(out + x, NEG_SLOPE)


def make_params(key, C):
    ks = jax.random.split(key, 12)
    eps = 1e-5

    def bn_params(kg, kb, km, kv):
        gamma = jax.random.uniform(kg, (C,), minval=0.5, maxval=1.5)
        beta = 0.1 * jax.random.normal(kb, (C,))
        mean = 0.1 * jax.random.normal(km, (C,))
        var = jax.random.uniform(kv, (C,), minval=0.5, maxval=1.5)
        scale = gamma / jnp.sqrt(var + eps)
        shift = beta - mean * scale
        return jnp.stack([scale, shift]).astype(jnp.float32)      # (2, C)

    w1 = 0.2 * jax.random.normal(ks[0], (C, C), jnp.float32)          # (Cin, Cout)
    b1 = 0.1 * jax.random.normal(ks[1], (C,), jnp.float32)
    w2 = 0.1 * jax.random.normal(ks[2], (3, 3, C, C), jnp.float32)    # HWIO
    b2 = 0.1 * jax.random.normal(ks[3], (C,), jnp.float32)
    w3 = 0.2 * jax.random.normal(ks[4], (C, C), jnp.float32)
    b3 = 0.1 * jax.random.normal(ks[5], (C,), jnp.float32)
    bn1 = bn_params(ks[6], ks[7], ks[8], ks[9])
    bn2 = bn_params(ks[10], ks[11], ks[6], ks[7])
    bn3 = bn_params(ks[8], ks[9], ks[10], ks[11])
    return (w1, b1, bn1, w2, b2, bn2, w3, b3, bn3)


if __name__ == "__main__":
    key = jax.random.PRNGKey(0)
    kx, kp = jax.random.split(key)

    N, H, W, C = 2, 16, 16, 4   # inplanes == outplanes == 4, stride=1, downsample=None
    x = jax.random.normal(kx, (N, H, W, C), jnp.float32)
    params = make_params(kp, C)

    out = jax.block_until_ready(res_down_block(x, params))
    ref = jax.block_until_ready(ref_forward(x, params))

    assert out.shape == (N, H, W, C)
    err = float(jnp.max(jnp.abs(out - ref)))
    assert jnp.allclose(out, ref, atol=2e-4, rtol=2e-4), err

    print("KERNEL_OK")
</pallas_src>

<mosaic_0001>
module attributes {stable_mosaic.version = 11 : i64} {
  func.func @res_down_block_kernel(%arg0: i32, %arg1: memref<32x64xf32, #tpu.memory_space<vmem>>, %arg2: memref<64x64xf32, #tpu.memory_space<vmem>>, %arg3: memref<3x64x64xf32, #tpu.memory_space<vmem>>, %arg4: memref<64x64xf32, #tpu.memory_space<vmem>>, %arg5: memref<3x1x64xf32, #tpu.memory_space<vmem>>, %arg6: memref<32x64xf32, #tpu.memory_space<vmem>>, %arg7: memref<2x18x64xf32, #tpu.memory_space<vmem>>) attributes {dimension_semantics = [#tpu.dimension_semantics<arbitrary>], iteration_bounds = array<i64: 1>, scalar_prefetch = 0 : i64, scratch_operands = 1 : i64, tpu.core_type = #tpu.core_type<tc>, window_params = [{transform_indices = @transform_0, window_bounds = array<i64: 32, 64>}, {pipeline_mode = #tpu.pipeline_mode<synchronous>, transform_indices = @transform_1, window_bounds = array<i64: 64, 64>}, {pipeline_mode = #tpu.pipeline_mode<synchronous>, transform_indices = @transform_2, window_bounds = array<i64: 3, 64, 64>}, {pipeline_mode = #tpu.pipeline_mode<synchronous>, transform_indices = @transform_3, window_bounds = array<i64: 64, 64>}, {pipeline_mode = #tpu.pipeline_mode<synchronous>, transform_indices = @transform_4, window_bounds = array<i64: 3, 1, 64>}, {transform_indices = @transform_5, window_bounds = array<i64: 32, 64>}]} {
    %c0_i32 = arith.constant 0 : i32
    %0 = arith.cmpi eq, %arg0, %c0_i32 : i32
    %1 = arith.extui %0 : i1 to i32
    %c0_i32_0 = arith.constant 0 : i32
    %2 = arith.cmpi ne, %1, %c0_i32_0 : i32
    scf.if %2 {
      %cst_47 = arith.constant 0.000000e+00 : f32
      %58 = vector.broadcast %cst_47 : f32 to vector<2x18x64xf32>
      %c0_48 = arith.constant 0 : index
      %c0_49 = arith.constant 0 : index
      %c0_50 = arith.constant 0 : index
      %59 = vector.load %arg7[%c0_48, %c0_49, %c0_50] : memref<2x18x64xf32, #tpu.memory_space<vmem>>, vector<2x18x64xf32>
      tpu.vector_store %arg7[%c0_48, %c0_49, %c0_50], %58 {strides = array<i32>} : memref<2x18x64xf32, #tpu.memory_space<vmem>>, vector<2x18x64xf32>,
    } else {
    }
    %c0 = arith.constant 0 : index
    %c0_1 = arith.constant 0 : index
    %3 = vector.load %arg1[%c0, %c0_1] : memref<32x64xf32, #tpu.memory_space<vmem>>, vector<32x64xf32>
    %c0_2 = arith.constant 0 : index
    %c0_3 = arith.constant 0 : index
    %4 = vector.load %arg2[%c0_2, %c0_3] : memref<64x64xf32, #tpu.memory_space<vmem>>, vector<64x64xf32>
    %cst = arith.constant dense<0.000000e+00> : vector<32x64xf32>
    %5 = tpu.matmul %3, %4, %cst {dimension_numbers = #tpu.dot_dimension_numbers<[1], [0], [0], [1], [0, 0, 1, 1], [], []>} : vector<32x64xf32>, vector<64x64xf32>, vector<32x64xf32> -> vector<32x64xf32>
    %c0_4 = arith.constant 0 : index
    %c0_5 = arith.constant 0 : index
    %c0_6 = arith.constant 0 : index
    %6 = vector.load %arg5[%c0_4, %c0_5, %c0_6] : memref<3x1x64xf32, #tpu.memory_space<vmem>>, vector<1x1x64xf32>
    %7 = vector.shape_cast %6 : vector<1x1x64xf32> to vector<1x64xf32>
    %8 = vector.broadcast %7 : vector<1x64xf32> to vector<32x64xf32>
    %9 = arith.addf %5, %8 : vector<32x64xf32>
    %cst_7 = arith.constant 0.000000e+00 : f32
    %10 = vector.broadcast %cst_7 : f32 to vector<32x64xf32>
    %11 = arith.cmpf ogt, %9, %10 : vector<32x64xf32>
    %cst_8 = arith.constant 0.00999999977 : f32
    %12 = vector.broadcast %cst_8 : f32 to vector<32x64xf32>
    %13 = arith.mulf %12, %9 : vector<32x64xf32>
    %14 = arith.select %11, %9, %13 : vector<32x64xi1>, vector<32x64xf32>
    %15 = vector.shape_cast %14 : vector<32x64xf32> to vector<2x16x64xf32>
    %c0_9 = arith.constant 0 : index
    %c1 = arith.constant 1 : index
    %c0_10 = arith.constant 0 : index
    %16 = vector.load %arg7[%c0_9, %c1, %c0_10] : memref<2x18x64xf32, #tpu.memory_space<vmem>>, vector<2x16x64xf32>
    tpu.vector_store %arg7[%c0_9, %c1, %c0_10], %15 {strides = array<i32>} : memref<2x18x64xf32, #tpu.memory_space<vmem>>, vector<2x16x64xf32>,
    %cst_11 = arith.constant 0.000000e+00 : f32
    %17 = vector.broadcast %cst_11 : f32 to vector<32x64xf32>
    %c0_12 = arith.constant 0 : index
    %c0_13 = arith.constant 0 : index
    %c0_14 = arith.constant 0 : index
    %18 = vector.load %arg7[%c0_12, %c0_13, %c0_14] : memref<2x18x64xf32, #tpu.memory_space<vmem>>, vector<2x16x64xf32>
    %19 = vector.shape_cast %18 : vector<2x16x64xf32> to vector<32x64xf32>
    %c0_15 = arith.constant 0 : index
    %c0_16 = arith.constant 0 : index
    %c0_17 = arith.constant 0 : index
    %20 = vector.load %arg3[%c0_15, %c0_16, %c0_17] : memref<3x64x64xf32, #tpu.memory_space<vmem>>, vector<1x64x64xf32>
    %21 = vector.shape_cast %20 : vector<1x64x64xf32> to vector<64x64xf32>
    %cst_18 = arith.constant dense<0.000000e+00> : vector<32x64xf32>
    %22 = tpu.matmul %19, %21, %cst_18 {dimension_numbers = #tpu.dot_dimension_numbers<[1], [0], [0], [1], [0, 0, 1, 1], [], []>} : vector<32x64xf32>, vector<64x64xf32>, vector<32x64xf32> -> vector<32x64xf32>
    %23 = arith.addf %17, %22 : vector<32x64xf32>
    %c0_19 = arith.constant 0 : index
    %c1_20 = arith.constant 1 : index
    %c0_21 = arith.constant 0 : index
    %24 = vector.load %arg7[%c0_19, %c1_20, %c0_21] : memref<2x18x64xf32, #tpu.memory_space<vmem>>, vector<2x16x64xf32>
    %25 = vector.shape_cast %24 : vector<2x16x64xf32> to vector<32x64xf32>
    %c1_22 = arith.constant 1 : index
    %c0_23 = arith.constant 0 : index
    %c0_24 = arith.constant 0 : index
    %26 = vector.load %arg3[%c1_22, %c0_23, %c0_24] : memref<3x64x64xf32, #tpu.memory_space<vmem>>, vector<1x64x64xf32>
    %27 = vector.shape_cast %26 : vector<1x64x64xf32> to vector<64x64xf32>
    %cst_25 = arith.constant dense<0.000000e+00> : vector<32x64xf32>
    %28 = tpu.matmul %25, %27, %cst_25 {dimension_numbers = #tpu.dot_dimension_numbers<[1], [0], [0], [1], [0, 0, 1, 1], [], []>} : vector<32x64xf32>, vector<64x64xf32>, vector<32x64xf32> -> vector<32x64xf32>
    %29 = arith.addf %23, %28 : vector<32x64xf32>
    %c0_26 = arith.constant 0 : index
    %c2 = arith.constant 2 : index
    %c0_27 = arith.constant 0 : index
    %30 = vector.load %arg7[%c0_26, %c2, %c0_27] : memref<2x18x64xf32, #tpu.memory_space<vmem>>, vector<2x16x64xf32>
    %31 = vector.shape_cast %30 : vector<2x16x64xf32> to vector<32x64xf32>
    %c2_28 = arith.constant 2 : index
    %c0_29 = arith.constant 0 : index
    %c0_30 = arith.constant 0 : index
    %32 = vector.load %arg3[%c2_28, %c0_29, %c0_30] : memref<3x64x64xf32, #tpu.memory_space<vmem>>, vector<1x64x64xf32>
    %33 = vector.shape_cast %32 : vector<1x64x64xf32> to vector<64x64xf32>
    %cst_31 = arith.constant dense<0.000000e+00> : vector<32x64xf32>
    %34 = tpu.matmul %31, %33, %cst_31 {dimension_numbers = #tpu.dot_dimension_numbers<[1], [0], [0], [1], [0, 0, 1, 1], [], []>} : vector<32x64xf32>, vector<64x64xf32>, vector<32x64xf32> -> vector<32x64xf32>
    %35 = arith.addf %29, %34 : vector<32x64xf32>
    %c1_32 = arith.constant 1 : index
    %c0_33 = arith.constant 0 : index
    %c0_34 = arith.constant 0 : index
    %36 = vector.load %arg5[%c1_32, %c0_33, %c0_34] : memref<3x1x64xf32, #tpu.memory_space<vmem>>, vector<1x1x64xf32>
    %37 = vector.shape_cast %36 : vector<1x1x64xf32> to vector<1x64xf32>
    %38 = vector.broadcast %37 : vector<1x64xf32> to vector<32x64xf32>
    %39 = arith.addf %35, %38 : vector<32x64xf32>
    %cst_35 = arith.constant 0.000000e+00 : f32
    %40 = vector.broadcast %cst_35 : f32 to vector<32x64xf32>
    %41 = arith.cmpf ogt, %39, %40 : vector<32x64xf32>
    %cst_36 = arith.constant 0.00999999977 : f32
    %42 = vector.broadcast %cst_36 : f32 to vector<32x64xf32>
    %43 = arith.mulf %42, %39 : vector<32x64xf32>
    %44 = arith.select %41, %39, %43 : vector<32x64xi1>, vector<32x64xf32>
    %c0_37 = arith.constant 0 : index
    %c0_38 = arith.constant 0 : index
    %45 = vector.load %arg4[%c0_37, %c0_38] : memref<64x64xf32, #tpu.memory_space<vmem>>, vector<64x64xf32>
    %cst_39 = arith.constant dense<0.000000e+00> : vector<32x64xf32>
    %46 = tpu.matmul %44, %45, %cst_39 {dimension_numbers = #tpu.dot_dimension_numbers<[1], [0], [0], [1], [0, 0, 1, 1], [], []>} : vector<32x64xf32>, vector<64x64xf32>, vector<32x64xf32> -> vector<32x64xf32>
    %c2_40 = arith.constant 2 : index
    %c0_41 = arith.constant 0 : index
    %c0_42 = arith.constant 0 : index
    %47 = vector.load %arg5[%c2_40, %c0_41, %c0_42] : memref<3x1x64xf32, #tpu.memory_space<vmem>>, vector<1x1x64xf32>
    %48 = vector.shape_cast %47 : vector<1x1x64xf32> to vector<1x64xf32>
    %49 = vector.broadcast %48 : vector<1x64xf32> to vector<32x64xf32>
    %50 = arith.addf %46, %49 : vector<32x64xf32>
    %51 = arith.addf %50, %3 : vector<32x64xf32>
    %cst_43 = arith.constant 0.000000e+00 : f32
    %52 = vector.broadcast %cst_43 : f32 to vector<32x64xf32>
    %53 = arith.cmpf ogt, %51, %52 : vector<32x64xf32>
    %cst_44 = arith.constant 0.00999999977 : f32
    %54 = vector.broadcast %cst_44 : f32 to vector<32x64xf32>
    %55 = arith.mulf %54, %51 : vector<32x64xf32>
    %56 = arith.select %53, %51, %55 : vector<32x64xi1>, vector<32x64xf32>
    %c0_45 = arith.constant 0 : index
    %c0_46 = arith.constant 0 : index
    %57 = vector.load %arg6[%c0_45, %c0_46] : memref<32x64xf32, #tpu.memory_space<vmem>>, vector<32x64xf32>
    tpu.vector_store %arg6[%c0_45, %c0_46], %56 {strides = array<i32>} : memref<32x64xf32, #tpu.memory_space<vmem>>, vector<32x64xf32>,
    return
  }
  func.func @transform_0(%arg0: i32) -> (i32, i32) {
    %c0_i32 = arith.constant 0 : i32
    %c0_i32_0 = arith.constant 0 : i32
    return %arg0, %c0_i32 : i32, i32
  }
  func.func @transform_1(%arg0: i32) -> (i32, i32) {
    %c0_i32 = arith.constant 0 : i32
    %c0_i32_0 = arith.constant 0 : i32
    %c0_i32_1 = arith.constant 0 : i32
    return %c0_i32, %c0_i32_0 : i32, i32
  }
  func.func @transform_2(%arg0: i32) -> (i32, i32, i32) {
    %c0_i32 = arith.constant 0 : i32
    %c0_i32_0 = arith.constant 0 : i32
    %c0_i32_1 = arith.constant 0 : i32
    %c0_i32_2 = arith.constant 0 : i32
    return %c0_i32, %c0_i32_0, %c0_i32_1 : i32, i32, i32
  }
  func.func @transform_3(%arg0: i32) -> (i32, i32) {
    %c0_i32 = arith.constant 0 : i32
    %c0_i32_0 = arith.constant 0 : i32
    %c0_i32_1 = arith.constant 0 : i32
    return %c0_i32, %c0_i32_0 : i32, i32
  }
  func.func @transform_4(%arg0: i32) -> (i32, i32, i32) {
    %c0_i32 = arith.constant 0 : i32
    %c0_i32_0 = arith.constant 0 : i32
    %c0_i32_1 = arith.constant 0 : i32
    %c0_i32_2 = arith.constant 0 : i32
    return %c0_i32, %c0_i32_0, %c0_i32_1 : i32, i32, i32
  }
  func.func @transform_5(%arg0: i32) -> (i32, i32) {
    %c0_i32 = arith.constant 0 : i32
    %c0_i32_0 = arith.constant 0 : i32
    return %arg0, %c0_i32 : i32, i32
  }
}

</mosaic_0001>

<llo_original>
// kernel: tpu_custom_call.1
$region0: #{tpu_custom_call.1}
  #allocation0 [shape = 'u32[]', space=smem, size = 0x4, offset = 0x4, fixed_abs, tag = 'smem constant byte address 0x4 - core index']
  #allocation1 [shape = 'u32[72,128]{1,0:T(1,128)}', space=vmem, size = 0x9000, scoped, tag = 'internal scratch']
  #allocation2 [shape = 'f32[2,18,64]{2,1,0:T(8,128)}', space=vmem, size = 0x6000, scoped, tag = 'scratch operand']
  %s0 = inlined_call_operand.hbm [shape: f32[32,64], index: 0, kind: input, shape index: {}]
  %s1 = inlined_call_operand.hbm [shape: f32[64,64], index: 1, kind: input, shape index: {}]
  %s2 = inlined_call_operand.hbm [shape: f32[3,64,64], index: 2, kind: input, shape index: {}]
  %s3 = inlined_call_operand.hbm [shape: f32[64,64], index: 3, kind: input, shape index: {}]
  %s4 = inlined_call_operand.vmem [shape: f32[3,1,64], index: 4, kind: input, shape index: {}]
  %s5 = inlined_call_operand.hbm [shape: f32[32,64], index: 5, kind: output, shape index: {}]
  %s6 = sld [smem:[#allocation0]]
  $region50: #{tpu_custom_call.1} parent=0
    _
  %s8 = ssub.s32 1, %s6
  %s9 = scalar_select 0, %s8, %s6
  $region1: #{tpu_custom_call.1} parent=0
    #allocation3 [shape = 'u8[16384]{0}', space=vmem, size = 0x4000, scoped, tag = 'input window, operand 0, single buffered']
    #allocation4 [shape = 's32[1]{0}', space=sflag, size = 0x4, scoped, tag = 'scoped memory for tpu_custom_call.1']
    #allocation5 [shape = 's32[1]{0}', space=sflag, size = 0x4, scoped, tag = 'scoped memory for tpu_custom_call.1']
    #allocation6 [shape = 'u8[32768]{0}', space=vmem, size = 0x8000, scoped, tag = 'input window, operand 1, single buffered']
    #allocation7 [shape = 's32[1]{0}', space=sflag, size = 0x4, scoped, tag = 'scoped memory for tpu_custom_call.1']
    #allocation8 [shape = 'u8[98304]{0}', space=vmem, size = 0x18000, scoped, tag = 'input window, operand 2, single buffered']
    #allocation9 [shape = 'u8[32768]{0}', space=vmem, size = 0x8000, scoped, tag = 'input window, operand 3, single buffered']
    #allocation10 [shape = 's32[1]{0}', space=sflag, size = 0x4, scoped, tag = 'scoped memory for tpu_custom_call.1']
    #allocation11 [shape = 'u8[16384]{0}', space=vmem, size = 0x4000, scoped, tag = 'output window, operand 0, single buffered']
    %10 = vsyncpa [#allocation4], 0
    %11 = vsyncpa [#allocation7], 0
    %12 = vsyncpa [#allocation10], 0
    %13 = vsyncpa [#allocation5], 0
    // Predicated region
    $region2: #{tpu_custom_call.1} parent=1 // pred_check
      _
    $region3: #{tpu_custom_call.1} parent=1 // pred_check_branch
      %15 = sbr.rel (0) target = $region5
    $region4: #{tpu_custom_call.1} parent=1 // pred_region
      %17 = vsyncadd [#allocation4], 0
      %s18 = sshll.u32 %s0, 4
      %s19 = int_to_ptr.hbm [resolvable:$true] %s18
      %s20 = sshll.u32 [#allocation3], 4
      %s21 = int_to_ptr.vmem [resolvable:$true] %s20
      %26 = dma.hbm_to_vmem [thread:$0]  %s19, 512, %s21, [#allocation4], 128, 128, 8
    $region5: #{tpu_custom_call.1} parent=1 // pred_fallthru
      _
    // Predicated region
    $region6: #{tpu_custom_call.1} parent=1 // pred_check
      _
    $region7: #{tpu_custom_call.1} parent=1 // pred_check_branch
      %28 = sbr.rel (0) target = $region9
    $region8: #{tpu_custom_call.1} parent=1 // pred_region
      %30 = vsyncadd [#allocation7], 0
      %s31 = sshll.u32 %s1, 4
      %s32 = int_to_ptr.hbm [resolvable:$true] %s31
      %s33 = sshll.u32 [#allocation6], 4
      %s34 = int_to_ptr.vmem [resolvable:$true] %s33
      %39 = dma.hbm_to_vmem [thread:$0]  %s32, 1024, %s34, [#allocation7], 128, 128, 8
    $region9: #{tpu_custom_call.1} parent=1 // pred_fallthru
      _
    // Predicated region
    $region10: #{tpu_custom_call.1} parent=1 // pred_check
      _
    $region11: #{tpu_custom_call.1} parent=1 // pred_check_branch
      %41 = sbr.rel (0) target = $region13
    $region12: #{tpu_custom_call.1} parent=1 // pred_region
      %43 = vsyncadd [#allocation7], 0
      %s44 = sshll.u32 %s2, 4
      %s45 = int_to_ptr.hbm [resolvable:$true] %s44
      %s46 = sshll.u32 [#allocation8], 4
      %s47 = int_to_ptr.vmem [resolvable:$true] %s46
      %52 = dma.hbm_to_vmem [thread:$0]  %s45, 3072, %s47, [#allocation7], 128, 128, 8
    $region13: #{tpu_custom_call.1} parent=1 // pred_fallthru
      _
    // Predicated region
    $region14: #{tpu_custom_call.1} parent=1 // pred_check
      _
    $region15: #{tpu_custom_call.1} parent=1 // pred_check_branch
      %54 = sbr.rel (0) target = $region17
    $region16: #{tpu_custom_call.1} parent=1 // pred_region
      %56 = vsyncadd [#allocation10], 0
      %s57 = sshll.u32 %s3, 4
      %s58 = int_to_ptr.hbm [resolvable:$true] %s57
      %s59 = sshll.u32 [#allocation9], 4
      %s60 = int_to_ptr.vmem [resolvable:$true] %s59
      %65 = dma.hbm_to_vmem [thread:$0]  %s58, 1024, %s60, [#allocation10], 128, 128, 8
    $region17: #{tpu_custom_call.1} parent=1 // pred_fallthru
      _
    // Predicated region
    $region18: #{tpu_custom_call.1} parent=1 // pred_check
      _
    $region19: #{tpu_custom_call.1} parent=1 // pred_check_branch
      %67 = sbr.rel (0) target = $region21
    $region20: #{tpu_custom_call.1} parent=1 // pred_region
      _
    $region21: #{tpu_custom_call.1} parent=1 // pred_fallthru
      _
    // Predicated region
    $region22: #{tpu_custom_call.1} parent=1 // pred_check
      _
    $region23: #{tpu_custom_call.1} parent=1 // pred_check_branch
      %69 = sbr.rel (0) target = $region25
    $region24: #{tpu_custom_call.1} parent=1 // pred_region
      %71 = dma.done [#allocation4], 512
    $region25: #{tpu_custom_call.1} parent=1 // pred_fallthru
      _
    // Predicated region
    $region26: #{tpu_custom_call.1} parent=1 // pred_check
      _
    $region27: #{tpu_custom_call.1} parent=1 // pred_check_branch
      %73 = sbr.rel (0) target = $region29
    $region28: #{tpu_custom_call.1} parent=1 // pred_region
      %75 = dma.done [#allocation7], 1024
    $region29: #{tpu_custom_call.1} parent=1 // pred_fallthru
      _
    // Predicated region
    $region30: #{tpu_custom_call.1} parent=1 // pred_check
      _
    $region31: #{tpu_custom_call.1} parent=1 // pred_check_branch
      %77 = sbr.rel (0) target = $region33
    $region32: #{tpu_custom_call.1} parent=1 // pred_region
      %79 = dma.done [#allocation7], 3072
    $region33: #{tpu_custom_call.1} parent=1 // pred_fallthru
      _
    // Predicated region
    $region34: #{tpu_custom_call.1} parent=1 // pred_check
      _
    $region35: #{tpu_custom_call.1} parent=1 // pred_check_branch
      %81 = sbr.rel (0) target = $region37
    $region36: #{tpu_custom_call.1} parent=1 // pred_region
      %83 = dma.done [#allocation10], 1024
    $region37: #{tpu_custom_call.1} parent=1 // pred_fallthru
      _
    %p84 = scmp.eq.s32.totalorder 0, 0
    // Predicated region
    $region38: #{tpu_custom_call.1} parent=1 // pred_check
      %p85 = pneg %p84
    $region39: #{tpu_custom_call.1} parent=1 // pred_check_branch
      %87 = sbr.rel (%p85) target = $region41
    $region40: #{tpu_custom_call.1} parent=1 // pred_region
      %vm88 = vcmask 523264
      %89 = vst.msk [vmem:[#allocation2] sm:$0xff] %vm88, 0.0
      %90 = vst.msk [vmem:[#allocation2 + $0x8] sm:$0xff] %vm88, 0.0
      %vm91 = vcmask 517120
      %92 = vst.msk [vmem:[#allocation2 + $0x10] sm:$0x3] %vm91, 0.0
      %93 = vst.msk [vmem:[#allocation2 + $0x18] sm:$0xff] %vm88, 0.0
      %94 = vst.msk [vmem:[#allocation2 + $0x20] sm:$0xff] %vm88, 0.0
      %95 = vst.msk [vmem:[#allocation2 + $0x28] sm:$0x3] %vm91, 0.0
    $region41: #{tpu_custom_call.1} parent=1 // pred_fallthru
      _
    %v96 = vld [vmem:[#allocation3] sm:$0xff]
    %v97 = vld [vmem:[#allocation3 + $0x8] sm:$0xff]
    %v98 = vld [vmem:[#allocation3 + $0x10] sm:$0xff]
    %v99 = vld [vmem:[#allocation3 + $0x18] sm:$0xff]
    %v100 = vld [vmem:[#allocation6] sm:$0xff]
    %v101 = vld [vmem:[#allocation6 + $0x8] sm:$0xff]
    %v102 = vld [vmem:[#allocation6 + $0x10] sm:$0xff]
    %v103 = vld [vmem:[#allocation6 + $0x18] sm:$0xff]
    %v104 = vld [vmem:[#allocation6 + $0x20] sm:$0xff]
    %v105 = vld [vmem:[#allocation6 + $0x28] sm:$0xff]
    %v106 = vld [vmem:[#allocation6 + $0x30] sm:$0xff]
    %v107 = vld [vmem:[#allocation6 + $0x38] sm:$0xff]
    %v108 = vld [vmem:[%s4] sm:$0x1]
    %v110 = vperm.slane %v108, 0
    %vm112 = vcmask 523264
    %v114 = vsel %vm112, %v96, 0
    %v117 = vsel %vm112, %v97, 0
    %v120 = vsel %vm112, %v98, 0
    %v123 = vsel %vm112, %v99, 0
    %125 = vmatpush.msra.mxu0 0.0
    %126 = vmatpush.msra.mxu0 0.0
    %127 = vmatpush.msra.mxu0 0.0
    %128 = vmatpush.msra.mxu0 0.0
    %129 = vmatpush.msra.mxu0 0.0
    %130 = vmatpush.msra.mxu0 0.0
    %131 = vmatpush.msra.mxu0 0.0
    %132 = vmatpush.msra.mxu0 0.0
    %133 = vmatpush.msra.mxu0 %v107
    %134 = vmatpush.msra.mxu0 %v106
    %135 = vmatpush.msra.mxu0 %v105
    %136 = vmatpush.msra.mxu0 %v104
    %137 = vmatpush.msra.mxu0 %v103
    %138 = vmatpush.msra.mxu0 %v102
    %139 = vmatpush.msra.mxu0 %v101
    %140 = vmatpush.msra.mxu0 %v100
    %141 = vmatmul.f32.gmra.mxu0 %v114
    %v142 = vpop.f32.mrf.mxu0
    %v143 = vadd.f32 %v110, %v142
    %144 = vmatmul.f32.gmra.mxu0 %v117
    %v145 = vpop.f32.mrf.mxu0
    %v146 = vadd.f32 %v110, %v145
    %147 = vmatmul.f32.gmra.mxu0 %v120
    %v148 = vpop.f32.mrf.mxu0
    %v149 = vadd.f32 %v110, %v148
    %150 = vmatmul.f32.gmra.mxu0 %v123
    %v151 = vpop.f32.mrf.mxu0
    %v152 = vadd.f32 %v110, %v151
    %153 = vdwg.mxu0
    %vm154 = vcmp.gt.f32.partialorder %v143, 0.0
    %vm155 = vcmp.gt.f32.partialorder %v146, 0.0
    %vm156 = vcmp.gt.f32.partialorder %v149, 0.0
    %vm157 = vcmp.gt.f32.partialorder %v152, 0.0
    %v158 = vmul.f32 %v143, 0.01
    %v159 = vmul.f32 %v146, 0.01
    %v160 = vmul.f32 %v149, 0.01
    %v161 = vmul.f32 %v152, 0.01
    %v162 = vsel %vm154, %v143, %v158
    %v163 = vsel %vm155, %v146, %v159
    %v164 = vsel %vm156, %v149, %v160
    %v165 = vsel %vm157, %v152, %v161
    %166 = vst.msk [vmem:[#allocation2 + $0x1] sm:$0xff] %vm112, %v162
    %167 = vst.msk [vmem:[#allocation2 + $0x9] sm:$0xff] %vm112, %v163
    %168 = vst.msk [vmem:[#allocation2 + $0x19] sm:$0xff] %vm112, %v164
    %169 = vst.msk [vmem:[#allocation2 + $0x21] sm:$0xff] %vm112, %v165
    %v170 = vld [vmem:[#allocation2] sm:$0xff]
    %v171 = vld [vmem:[#allocation2 + $0x8] sm:$0xff]
    %v172 = vld [vmem:[#allocation2 + $0x18] sm:$0xff]
    %v173 = vld [vmem:[#allocation2 + $0x20] sm:$0xff]
    %v174 = vld [vmem:[#allocation8] sm:$0xff]
    %v175 = vld [vmem:[#allocation8 + $0x8] sm:$0xff]
    %v176 = vld [vmem:[#allocation8 + $0x10] sm:$0xff]
    %v177 = vld [vmem:[#allocation8 + $0x18] sm:$0xff]
    %v178 = vld [vmem:[#allocation8 + $0x20] sm:$0xff]
    %v179 = vld [vmem:[#allocation8 + $0x28] sm:$0xff]
    %v180 = vld [vmem:[#allocation8 + $0x30] sm:$0xff]
    %v181 = vld [vmem:[#allocation8 + $0x38] sm:$0xff]
    %v182 = vld [vmem:[#allocation2 + $0x1] sm:$0xff]
    %v183 = vld [vmem:[#allocation2 + $0x9] sm:$0xff]
    %v184 = vld [vmem:[#allocation2 + $0x19] sm:$0xff]
    %v185 = vld [vmem:[#allocation2 + $0x21] sm:$0xff]
    %s186 = scalar_lea.vmem [#allocation8], 64
    %v187 = vld [vmem:[%s186] sm:$0xff]
    %v188 = vld [vmem:[%s186 + $0x8] sm:$0xff]
    %v189 = vld [vmem:[%s186 + $0x10] sm:$0xff]
    %v190 = vld [vmem:[%s186 + $0x18] sm:$0xff]
    %v191 = vld [vmem:[%s186 + $0x20] sm:$0xff]
    %v192 = vld [vmem:[%s186 + $0x28] sm:$0xff]
    %v193 = vld [vmem:[%s186 + $0x30] sm:$0xff]
    %v194 = vld [vmem:[%s186 + $0x38] sm:$0xff]
    %v196 = vsel %vm112, %v182, 0
    %v199 = vsel %vm112, %v183, 0
    %v202 = vsel %vm112, %v184, 0
    %v205 = vsel %vm112, %v185, 0
    %207 = vmatpush.msra.mxu0 0.0
    %208 = vmatpush.msra.mxu0 0.0
    %209 = vmatpush.msra.mxu0 0.0
    %210 = vmatpush.msra.mxu0 0.0
    %211 = vmatpush.msra.mxu0 0.0
    %212 = vmatpush.msra.mxu0 0.0
    %213 = vmatpush.msra.mxu0 0.0
    %214 = vmatpush.msra.mxu0 0.0
    %215 = vmatpush.msra.mxu0 %v194
    %216 = vmatpush.msra.mxu0 %v193
    %217 = vmatpush.msra.mxu0 %v192
    %218 = vmatpush.msra.mxu0 %v191
    %219 = vmatpush.msra.mxu0 %v190
    %220 = vmatpush.msra.mxu0 %v189
    %221 = vmatpush.msra.mxu0 %v188
    %222 = vmatpush.msra.mxu0 %v187
    %223 = vmatmul.f32.gmra.mxu0 %v196
    %v224 = vpop.f32.mrf.mxu0
    %v225 = vadd.f32 0.0, %v224
    %226 = vmatmul.f32.gmra.mxu0 %v199
    %v227 = vpop.f32.mrf.mxu0
    %v228 = vadd.f32 0.0, %v227
    %229 = vmatmul.f32.gmra.mxu0 %v202
    %v230 = vpop.f32.mrf.mxu0
    %v231 = vadd.f32 0.0, %v230
    %232 = vmatmul.f32.gmra.mxu0 %v205
    %v233 = vpop.f32.mrf.mxu0
    %v234 = vadd.f32 0.0, %v233
    %235 = vdwg.mxu0
    %v237 = vsel %vm112, %v170, 0
    %v240 = vsel %vm112, %v171, 0
    %v243 = vsel %vm112, %v172, 0
    %v246 = vsel %vm112, %v173, 0
    %248 = vmatpush.msra.mxu0 0.0
    %249 = vmatpush.msra.mxu0 0.0
    %250 = vmatpush.msra.mxu0 0.0
    %251 = vmatpush.msra.mxu0 0.0
    %252 = vmatpush.msra.mxu0 0.0
    %253 = vmatpush.msra.mxu0 0.0
    %254 = vmatpush.msra.mxu0 0.0
    %255 = vmatpush.msra.mxu0 0.0
    %256 = vmatpush.msra.mxu0 %v181
    %257 = vmatpush.msra.mxu0 %v180
    %258 = vmatpush.msra.mxu0 %v179
    %259 = vmatpush.msra.mxu0 %v178
    %260 = vmatpush.msra.mxu0 %v177
    %261 = vmatpush.msra.mxu0 %v176
    %262 = vmatpush.msra.mxu0 %v175
    %263 = vmatpush.msra.mxu0 %v174
    %264 = vmatmul.f32.gmra.mxu0 %v237
    %v265 = vpop.f32.mrf.mxu0
    %v266 = vadd.f32 %v225, %v265
    %267 = vmatmul.f32.gmra.mxu0 %v240
    %v268 = vpop.f32.mrf.mxu0
    %v269 = vadd.f32 %v228, %v268
    %270 = vmatmul.f32.gmra.mxu0 %v243
    %v271 = vpop.f32.mrf.mxu0
    %v272 = vadd.f32 %v231, %v271
    %273 = vmatmul.f32.gmra.mxu0 %v246
    %v274 = vpop.f32.mrf.mxu0
    %v275 = vadd.f32 %v234, %v274
    %276 = vdwg.mxu0
    %v277 = vld [vmem:[#allocation2 + $0x2] sm:$0xff]
    %v278 = vld [vmem:[#allocation2 + $0xa] sm:$0xff]
    %v279 = vld [vmem:[#allocation2 + $0x1a] sm:$0xff]
    %v280 = vld [vmem:[#allocation2 + $0x22] sm:$0xff]
    %s281 = scalar_lea.vmem [#allocation8], 128
    %v282 = vld [vmem:[%s281] sm:$0xff]
    %v283 = vld [vmem:[%s281 + $0x8] sm:$0xff]
    %v284 = vld [vmem:[%s281 + $0x10] sm:$0xff]
    %v285 = vld [vmem:[%s281 + $0x18] sm:$0xff]
    %v286 = vld [vmem:[%s281 + $0x20] sm:$0xff]
    %v287 = vld [vmem:[%s281 + $0x28] sm:$0xff]
    %v288 = vld [vmem:[%s281 + $0x30] sm:$0xff]
    %v289 = vld [vmem:[%s281 + $0x38] sm:$0xff]
    %v291 = vsel %vm112, %v277, 0
    %v294 = vsel %vm112, %v278, 0
    %v297 = vsel %vm112, %v279, 0
    %v300 = vsel %vm112, %v280, 0
    %302 = vmatpush.msra.mxu0 0.0
    %303 = vmatpush.msra.mxu0 0.0
    %304 = vmatpush.msra.mxu0 0.0
    %305 = vmatpush.msra.mxu0 0.0
    %306 = vmatpush.msra.mxu0 0.0
    %307 = vmatpush.msra.mxu0 0.0
    %308 = vmatpush.msra.mxu0 0.0
    %309 = vmatpush.msra.mxu0 0.0
    %310 = vmatpush.msra.mxu0 %v289
    %311 = vmatpush.msra.mxu0 %v288
    %312 = vmatpush.msra.mxu0 %v287
    %313 = vmatpush.msra.mxu0 %v286
    %314 = vmatpush.msra.mxu0 %v285
    %315 = vmatpush.msra.mxu0 %v284
    %316 = vmatpush.msra.mxu0 %v283
    %317 = vmatpush.msra.mxu0 %v282
    %318 = vmatmul.f32.gmra.mxu0 %v291
    %v319 = vpop.f32.mrf.mxu0
    %v320 = vadd.f32 0.0, %v319
    %321 = vmatmul.f32.gmra.mxu0 %v294
    %v322 = vpop.f32.mrf.mxu0
    %v323 = vadd.f32 0.0, %v322
    %324 = vmatmul.f32.gmra.mxu0 %v297
    %v325 = vpop.f32.mrf.mxu0
    %v326 = vadd.f32 0.0, %v325
    %327 = vmatmul.f32.gmra.mxu0 %v300
    %v328 = vpop.f32.mrf.mxu0
    %v329 = vadd.f32 0.0, %v328
    %330 = vdwg.mxu0
    %v331 = vadd.f32 %v266, %v320
    %v332 = vadd.f32 %v269, %v323
    %v333 = vadd.f32 %v272, %v326
    %v334 = vadd.f32 %v275, %v329
    %s335 = scalar_lea.vmem %s4, 1
    %v336 = vld [vmem:[%s335] sm:$0x1]
    %v338 = vperm.slane %v336, 0
    %v340 = vadd.f32 %v331, %v338
    %v341 = vadd.f32 %v332, %v338
    %v342 = vadd.f32 %v333, %v338
    %v343 = vadd.f32 %v334, %v338
    %vm344 = vcmp.gt.f32.partialorder %v340, 0.0
    %vm345 = vcmp.gt.f32.partialorder %v341, 0.0
    %vm346 = vcmp.gt.f32.partialorder %v342, 0.0
    %vm347 = vcmp.gt.f32.partialorder %v343, 0.0
    %v348 = vmul.f32 %v340, 0.01
    %v349 = vmul.f32 %v341, 0.01
    %v350 = vmul.f32 %v342, 0.01
    %v351 = vmul.f32 %v343, 0.01
    %v352 = vsel %vm344, %v340, %v348
    %v353 = vsel %vm345, %v341, %v349
    %v354 = vsel %vm346, %v342, %v350
    %v355 = vsel %vm347, %v343, %v351
    %v356 = vld [vmem:[#allocation9] sm:$0xff]
    %v357 = vld [vmem:[#allocation9 + $0x8] sm:$0xff]
    %v358 = vld [vmem:[#allocation9 + $0x10] sm:$0xff]
    %v359 = vld [vmem:[#allocation9 + $0x18] sm:$0xff]
    %v360 = vld [vmem:[#allocation9 + $0x20] sm:$0xff]
    %v361 = vld [vmem:[#allocation9 + $0x28] sm:$0xff]
    %v362 = vld [vmem:[#allocation9 + $0x30] sm:$0xff]
    %v363 = vld [vmem:[#allocation9 + $0x38] sm:$0xff]
    %s364 = scalar_lea.vmem %s4, 2
    %v365 = vld [vmem:[%s364] sm:$0x1]
    %v367 = vperm.slane %v365, 0
    %v370 = vsel %vm112, %v352, 0
    %v373 = vsel %vm112, %v353, 0
    %v376 = vsel %vm112, %v354, 0
    %v379 = vsel %vm112, %v355, 0
    %381 = vmatpush.msra.mxu0 0.0
    %382 = vmatpush.msra.mxu0 0.0
    %383 = vmatpush.msra.mxu0 0.0
    %384 = vmatpush.msra.mxu0 0.0
    %385 = vmatpush.msra.mxu0 0.0
    %386 = vmatpush.msra.mxu0 0.0
    %387 = vmatpush.msra.mxu0 0.0
    %388 = vmatpush.msra.mxu0 0.0
    %389 = vmatpush.msra.mxu0 %v363
    %390 = vmatpush.msra.mxu0 %v362
    %391 = vmatpush.msra.mxu0 %v361
    %392 = vmatpush.msra.mxu0 %v360
    %393 = vmatpush.msra.mxu0 %v359
    %394 = vmatpush.msra.mxu0 %v358
    %395 = vmatpush.msra.mxu0 %v357
    %396 = vmatpush.msra.mxu0 %v356
    %397 = vmatmul.f32.gmra.mxu0 %v370
    %v398 = vpop.f32.mrf.mxu0
    %v399 = vadd.f32 %v367, %v398
    %400 = vmatmul.f32.gmra.mxu0 %v373
    %v401 = vpop.f32.mrf.mxu0
    %v402 = vadd.f32 %v367, %v401
    %403 = vmatmul.f32.gmra.mxu0 %v376
    %v404 = vpop.f32.mrf.mxu0
    %v405 = vadd.f32 %v367, %v404
    %406 = vmatmul.f32.gmra.mxu0 %v379
    %v407 = vpop.f32.mrf.mxu0
    %v408 = vadd.f32 %v367, %v407
    %409 = vdwg.mxu0
    %v410 = vadd.f32 %v399, %v96
    %v411 = vadd.f32 %v402, %v97
    %v412 = vadd.f32 %v405, %v98
    %v413 = vadd.f32 %v408, %v99
    %vm414 = vcmp.gt.f32.partialorder %v410, 0.0
    %vm415 = vcmp.gt.f32.partialorder %v411, 0.0
    %vm416 = vcmp.gt.f32.partialorder %v412, 0.0
    %vm417 = vcmp.gt.f32.partialorder %v413, 0.0
    %v418 = vmul.f32 %v410, 0.01
    %v419 = vmul.f32 %v411, 0.01
    %v420 = vmul.f32 %v412, 0.01
    %v421 = vmul.f32 %v413, 0.01
    %v422 = vsel %vm414, %v410, %v418
    %v423 = vsel %vm415, %v411, %v419
    %v424 = vsel %vm416, %v412, %v420
    %v425 = vsel %vm417, %v413, %v421
    %426 = vst.msk [vmem:[#allocation11] sm:$0xff] %vm112, %v422
    %427 = vst.msk [vmem:[#allocation11 + $0x8] sm:$0xff] %vm112, %v423
    %428 = vst.msk [vmem:[#allocation11 + $0x10] sm:$0xff] %vm112, %v424
    %429 = vst.msk [vmem:[#allocation11 + $0x18] sm:$0xff] %vm112, %v425
    // Predicated region
    $region42: #{tpu_custom_call.1} parent=1 // pred_check
      _
    $region43: #{tpu_custom_call.1} parent=1 // pred_check_branch
      %431 = sbr.rel (0) target = $region45
    $region44: #{tpu_custom_call.1} parent=1 // pred_region
      %433 = vsyncadd [#allocation5], 0
      %s434 = sshll.u32 [#allocation11], 4
      %s435 = int_to_ptr.vmem [resolvable:$true] %s434
      %s436 = sshll.u32 %s5, 4
      %s437 = int_to_ptr.hbm [resolvable:$true] %s436
      %442 = dma.vmem_to_hbm [thread:$0]  %s435, 512, %s437, [#allocation5], 128, 128, 8
    $region45: #{tpu_custom_call.1} parent=1 // pred_fallthru
      _
    // Predicated region
    $region46: #{tpu_custom_call.1} parent=1 // pred_check
      _
    $region47: #{tpu_custom_call.1} parent=1 // pred_check_branch
      %444 = sbr.rel (0) target = $region49
    $region48: #{tpu_custom_call.1} parent=1 // pred_region
      %446 = dma.done [#allocation5], 512
    $region49: #{tpu_custom_call.1} parent=1 // pred_fallthru
      _
    %447 = vsyncpa [#allocation4], 1
    %448 = vsyncpa [#allocation7], 1
    %449 = vsyncpa [#allocation10], 1
    %450 = vsyncpa [#allocation5], 1

</llo_original>
